<compile_context>
chip_gen: v5e
topology: v5e:2x2
jax: 0.10.0
libtpu: 0.0.40
codegen_flags: <defaults>
</compile_context>

<pallas_src>
import functools

import jax
import jax.numpy as jnp
import numpy as np
from jax.experimental import pallas as pl
from jax.experimental.pallas import tpu as pltpu

LANE = 128


def _select_kernel(cond_ref, x_ref, o_ref, *, block):
    # cond_ref: SMEM (B*block,) f32 -- per-(batch, block) scalar weights
    # x_ref:    VMEM (1, block, tr, 128)
    # o_ref:    VMEM (1, tr, 128)
    b = pl.program_id(0)
    base = b * block
    acc = x_ref[0, 0].astype(jnp.float32) * cond_ref[base]
    if block <= 8:
        # Small block: static python loop -> fully unrolled accumulate chain.
        for i in range(1, block):
            acc = acc + x_ref[0, i].astype(jnp.float32) * cond_ref[base + i]
    else:
        # Large block: fori_loop bounds live ranges (avoids vreg spills when
        # tr is large), with a small unroll for scheduler visibility.
        def body(i, a):
            return a + x_ref[0, i].astype(jnp.float32) * cond_ref[base + i]

        acc = jax.lax.fori_loop(1, block, body, acc, unroll=2)
    o_ref[0] = acc.astype(o_ref.dtype)


def _tile_rows(R, B, block, itemsize):
    """Auto-size the (tr, 128) row tile from a VMEM budget."""
    sub = {4: 8, 2: 16, 1: 32}.get(itemsize, 8)  # dtype sublane packing
    if R <= sub:
        return R  # single full-extent tile (block dim == array dim is legal)

    x_tile_target = 2 * 1024 * 1024   # ~2 MiB x tile per buffer
    vmem_budget = 24 * 1024 * 1024    # double-buffered in+out, v7x-safe

    tr = x_tile_target // (block * LANE * itemsize)
    tr = min(tr, vmem_budget // (2 * LANE * (block + 1) * itemsize))
    tr = max(sub, min((tr // sub) * sub, (R // sub) * sub))

    # Megacore: v7x has 2 TensorCores -- keep enough parallel grid extent.
    min_steps = 4
    while B * pl.cdiv(R, tr) < min_steps and tr > sub:
        tr = max(sub, ((tr // 2) // sub) * sub)
    return tr


def select_layer(x, cond, channel, block):
    """Pallas equivalent of select_layer.forward.

    x:    (B, block*channel, H, W)
    cond: (B, block)
    returns (B, channel, H, W), dtype = x.dtype
    """
    B, C_tot, H, W = x.shape
    assert C_tot == block * channel
    total = channel * H * W
    itemsize = jnp.dtype(x.dtype).itemsize

    x_flat = x.reshape(B, block, total)  # free (pure reshape, no copy)
    pad = (-total) % LANE
    if pad:
        # Rare case (channel*H*W not a multiple of 128): costs one extra pass
        # over x and out in HBM.
        # TODO(synk): ragged-lane flat-layout variant to drop this pad/slice.
        x_flat = jnp.pad(x_flat, ((0, 0), (0, 0), (0, pad)))
    R = (total + pad) // LANE
    x_r = x_flat.reshape(B, block, R, LANE)  # free (pure reshape, no copy)

    tr = _tile_rows(R, B, block, itemsize)
    n_tiles = pl.cdiv(R, tr)  # ragged tail tile handled by masked stores

    vmem_used = 2 * tr * LANE * (block + 1) * itemsize  # double-buffered in+out
    vmem_limit = int(min(32 * 1024 * 1024,
                         max(16 * 1024 * 1024, vmem_used + 4 * 1024 * 1024)))

    cond_flat = cond.reshape(B * block).astype(jnp.float32)

    out = pl.pallas_call(
        functools.partial(_select_kernel, block=block),
        out_shape=jax.ShapeDtypeStruct((B, R, LANE), x.dtype),
        grid=(B, n_tiles),
        in_specs=[
            # 1-D SMEM: no (8,128)-word padding blow-up for large B*block.
            pl.BlockSpec(memory_space=pltpu.MemorySpace.SMEM),
            pl.BlockSpec((1, block, tr, LANE), lambda b, t: (b, 0, t, 0)),
        ],
        out_specs=pl.BlockSpec((1, tr, LANE), lambda b, t: (b, t, 0)),
        compiler_params=pltpu.CompilerParams(
            dimension_semantics=("parallel", "parallel"),
            vmem_limit_bytes=vmem_limit,
        ),
    )(cond_flat, x_r)

    out_flat = out.reshape(B, R * LANE)
    if pad:
        out_flat = out_flat[:, :total]
    return out_flat.reshape(B, channel, H, W)


def _reference(x, cond, channel, block):
    B, _, H, W = x.shape
    x_split = x.reshape(B, block, channel, H, W)
    return jnp.einsum("bkchw,bk->bchw", x_split, cond)


def _check(key, B, channel, block, H, W):
    kx, kc = jax.random.split(key)
    x = jax.random.normal(kx, (B, block * channel, H, W), dtype=jnp.float32)
    cond = jax.random.normal(kc, (B, block), dtype=jnp.float32)
    out = jax.block_until_ready(select_layer(x, cond, channel, block))
    ref = _reference(x, cond, channel, block)
    np.testing.assert_allclose(np.asarray(out), np.asarray(ref),
                               rtol=1e-5, atol=1e-5)


if __name__ == "__main__":
    key = jax.random.PRNGKey(0)
    k1, k2, k3, k4, k5 = jax.random.split(key, 5)

    # 1) Shapes implied by the module (single tile per batch, unrolled block).
    _check(k1, B=2, channel=4, block=3, H=16, W=16)
    # 2) Multi-tile spatial axis; exercises the megacore min-steps tr shrink.
    _check(k2, B=2, channel=8, block=4, H=32, W=32)
    # 3) Large block -> fori_loop accumulation path.
    _check(k3, B=2, channel=4, block=16, H=16, W=16)
    # 4) Ragged row-tile boundary (R=10, tr=8) -> masked boundary stores.
    _check(k4, B=2, channel=5, block=2, H=16, W=16)
    # 5) Flattened size not a multiple of 128 -> pad/slice fallback path.
    _check(k5, B=2, channel=3, block=2, H=5, W=5)

    print("KERNEL_OK")
</pallas_src>

<mosaic_0001>
module attributes {stable_mosaic.version = 11 : i64} {
  func.func @_select_kernel(%arg0: i32, %arg1: i32, %arg2: memref<6xf32, #tpu.memory_space<smem>>, %arg3: memref<1x3x8x128xf32, #tpu.memory_space<vmem>>, %arg4: memref<1x8x128xf32, #tpu.memory_space<vmem>>) attributes {dimension_semantics = [#tpu.dimension_semantics<parallel>, #tpu.dimension_semantics<parallel>], iteration_bounds = array<i64: 2, 1>, scalar_prefetch = 0 : i64, scratch_operands = 0 : i64, tpu.core_type = #tpu.core_type<tc>, window_params = [{transform_indices = @transform_0, window_bounds = array<i64: 6>}, {transform_indices = @transform_1, window_bounds = array<i64: 1, 3, 8, 128>}, {transform_indices = @transform_2, window_bounds = array<i64: 1, 8, 128>}]} {
    %c3_i32 = arith.constant 3 : i32
    %0 = arith.muli %arg0, %c3_i32 : i32
    %c0 = arith.constant 0 : index
    %c0_0 = arith.constant 0 : index
    %c0_1 = arith.constant 0 : index
    %c0_2 = arith.constant 0 : index
    %1 = vector.load %arg3[%c0, %c0_0, %c0_1, %c0_2] : memref<1x3x8x128xf32, #tpu.memory_space<vmem>>, vector<1x1x8x128xf32>
    %2 = vector.shape_cast %1 : vector<1x1x8x128xf32> to vector<8x128xf32>
    %3 = arith.index_cast %0 : i32 to index
    %4 = memref.load %arg2[%3] : memref<6xf32, #tpu.memory_space<smem>>
    %5 = vector.broadcast %4 : f32 to vector<8x128xf32>
    %6 = arith.mulf %2, %5 : vector<8x128xf32>
    %c0_3 = arith.constant 0 : index
    %c1 = arith.constant 1 : index
    %c0_4 = arith.constant 0 : index
    %c0_5 = arith.constant 0 : index
    %7 = vector.load %arg3[%c0_3, %c1, %c0_4, %c0_5] : memref<1x3x8x128xf32, #tpu.memory_space<vmem>>, vector<1x1x8x128xf32>
    %8 = vector.shape_cast %7 : vector<1x1x8x128xf32> to vector<8x128xf32>
    %c1_i32 = arith.constant 1 : i32
    %9 = arith.addi %0, %c1_i32 : i32
    %10 = arith.index_cast %9 : i32 to index
    %11 = memref.load %arg2[%10] : memref<6xf32, #tpu.memory_space<smem>>
    %12 = vector.broadcast %11 : f32 to vector<8x128xf32>
    %13 = arith.mulf %8, %12 : vector<8x128xf32>
    %14 = arith.addf %6, %13 : vector<8x128xf32>
    %c0_6 = arith.constant 0 : index
    %c2 = arith.constant 2 : index
    %c0_7 = arith.constant 0 : index
    %c0_8 = arith.constant 0 : index
    %15 = vector.load %arg3[%c0_6, %c2, %c0_7, %c0_8] : memref<1x3x8x128xf32, #tpu.memory_space<vmem>>, vector<1x1x8x128xf32>
    %16 = vector.shape_cast %15 : vector<1x1x8x128xf32> to vector<8x128xf32>
    %c2_i32 = arith.constant 2 : i32
    %17 = arith.addi %0, %c2_i32 : i32
    %18 = arith.index_cast %17 : i32 to index
    %19 = memref.load %arg2[%18] : memref<6xf32, #tpu.memory_space<smem>>
    %20 = vector.broadcast %19 : f32 to vector<8x128xf32>
    %21 = arith.mulf %16, %20 : vector<8x128xf32>
    %22 = arith.addf %14, %21 : vector<8x128xf32>
    %c0_9 = arith.constant 0 : index
    %c0_10 = arith.constant 0 : index
    %c0_11 = arith.constant 0 : index
    %23 = vector.load %arg4[%c0_9, %c0_10, %c0_11] : memref<1x8x128xf32, #tpu.memory_space<vmem>>, vector<1x8x128xf32>
    %24 = vector.shape_cast %23 : vector<1x8x128xf32> to vector<8x128xf32>
    %25 = vector.shape_cast %22 : vector<8x128xf32> to vector<1x8x128xf32>
    tpu.vector_store %arg4[%c0_9, %c0_10, %c0_11], %25 {strides = array<i32>} : memref<1x8x128xf32, #tpu.memory_space<vmem>>, vector<1x8x128xf32>,
    return
  }
  func.func @transform_0(%arg0: i32, %arg1: i32) -> i32 {
    %c0_i32 = arith.constant 0 : i32
    %c0_i32_0 = arith.constant 0 : i32
    return %c0_i32 : i32
  }
  func.func @transform_1(%arg0: i32, %arg1: i32) -> (i32, i32, i32, i32) {
    %c0_i32 = arith.constant 0 : i32
    %c0_i32_0 = arith.constant 0 : i32
    %c0_i32_1 = arith.constant 0 : i32
    return %arg0, %c0_i32, %arg1, %c0_i32_0 : i32, i32, i32, i32
  }
  func.func @transform_2(%arg0: i32, %arg1: i32) -> (i32, i32, i32) {
    %c0_i32 = arith.constant 0 : i32
    %c0_i32_0 = arith.constant 0 : i32
    return %arg0, %arg1, %c0_i32 : i32, i32, i32
  }
}

</mosaic_0001>

<llo_original>
// kernel: tpu_custom_call.1
$region0: #{tpu_custom_call.1}
  #allocation0 [shape = 'u32[]', space=smem, size = 0x4, offset = 0x4, fixed_abs, tag = 'smem constant byte address 0x4 - core index']
  #allocation1 [shape = 'u32[72,128]{1,0:T(1,128)}', space=vmem, size = 0x9000, scoped, tag = 'internal scratch']
  %s0 = inlined_call_operand.hbm [shape: f32[6], index: 0, kind: input, shape index: {}]
  %s1 = inlined_call_operand.hbm [shape: f32[2,3,8,128], index: 1, kind: input, shape index: {}]
  %s2 = inlined_call_operand.hbm [shape: f32[2,8,128], index: 2, kind: output, shape index: {}]
  %s3 = sld [smem:[#allocation0]]
  $region49: #{tpu_custom_call.1} parent=0
    _
  %s5 = ssub.s32 1, %s3
  %s6 = scalar_select 0, %s5, %s3
  $region1: #{tpu_custom_call.1} parent=0
    #allocation2 [shape = 'u8[512]{0}', space=smem, size = 0x200, scoped, tag = 'input window, operand 0, single buffered']
    #allocation3 [shape = 's32[2]{0}', space=sflag, size = 0x8, scoped, tag = 'scoped memory for tpu_custom_call.1']
    #allocation4 [shape = 's32[2]{0}', space=sflag, size = 0x8, scoped, tag = 'scoped memory for tpu_custom_call.1']
    #allocation5 [shape = 's32[2]{0}', space=sflag, size = 0x8, scoped, tag = 'scoped memory for tpu_custom_call.1']
    #allocation6 [shape = 'u8[24576]{0}', space=vmem, size = 0x6000, scoped, tag = 'input window, operand 1']
    #allocation7 [shape = 'u8[8192]{0}', space=vmem, size = 0x2000, scoped, tag = 'output window, operand 0']
    %7 = vsyncpa [#allocation5], 0
    %8 = vsyncpa [#allocation3], 0
    %s9 = scalar_lea.sflag [#allocation3], 1
    %10 = vsyncpa %s9, 0
    %11 = vsyncpa [#allocation4], 0
    %s12 = scalar_lea.sflag [#allocation4], 1
    %13 = vsyncpa %s12, 0
    loop: start=0, step=1, limit=4
    $region2: #{tpu_custom_call.1} parent=1 // loop_pre_header
      _
    $region3: #{tpu_custom_call.1} parent=1 // loop_header
      %s15 = sphi 0, %s19
      %p16 = scmp.ge.s32.totalorder %s15, 4
      %s22 = sphi 0, %s34
      %s23 = sphi 0, %s30
      %s24 = sphi 0, %s22
      %s25 = sphi 0, %s23
      %s26 = sphi 0, %s24
      %s27 = sphi 0, %s25
      %s35 = sphi 0, %s35
      %s37 = sphi 0, %s35
      %s38 = sphi 0, %s37
      %s52 = sphi 0, %s38
      %s60 = sphi 0, %s62
      %s63 = sphi 0, %s60
      %s64 = sphi 0, %s63
      %s80 = sphi 0, %s64
      %s88 = sphi 0, %s90
      %s91 = sphi 0, %s88
      %s92 = sphi 0, %s91
      %s108 = sphi 0, %s92
    $region4: #{tpu_custom_call.1} parent=1 // loop_header_branch
      %18 = sbr.rel (%p16) target = $region8
    $region5: #{tpu_custom_call.1} parent=1 // loop_body
      %s20 = ssub.s32 %s15, 1
      %s21 = ssub.s32 %s15, 2
      %s28 = sadd.s32 1, %s23
      %p29 = scmp.ge.s32.totalorder %s28, 1
      %s30 = scalar_select %p29, 0, %s28
      %s31 = sadd.s32 1, %s22
      %s32 = scalar_select %p29, %s31, %s22
      %p33 = scmp.ge.s32.totalorder %s32, 2
      %s34 = scalar_select %p33, 0, %s32
      %s36 = sadd.s32 %s35, 1
      %p39 = scmp.eq.s32.totalorder %s15, 1
      %p40 = scmp.ne.s32.totalorder %s35, %s37
      %p41 = scmp.eq.s32.totalorder %s15, 0
      %p42 = por %p40, %p41
      %p43 = scmp.ne.s32.totalorder %s35, %s37
      %p44 = scmp.eq.s32.totalorder %s20, 1
      %p45 = por %p43, %p44
      %p46 = scmp.ne.s32.totalorder %s37, %s38
      %p47 = scmp.eq.s32.totalorder %s20, 0
      %p48 = por %p46, %p47
      %p49 = scmp.ne.s32.totalorder %s37, %s38
      %p50 = scmp.eq.s32.totalorder %s21, 1
      %p51 = por %p49, %p50
      %p53 = scmp.ne.s32.totalorder %s38, %s52
      %p54 = scmp.eq.s32.totalorder %s21, 0
      %p55 = por %p53, %p54
      %s56 = ssub.s32 %s22, %s34
      %s57 = ssub.s32 %s23, %s30
      %s58 = sor.u32 %s56, %s57
      %p59 = scmp.eq.s32.totalorder %s58, 0
      %s61 = sadd.s32 %s60, 1
      %s62 = scalar_select %p59, %s60, %s61
      %p65 = pneg %p59
      %p66 = scmp.eq.s32.totalorder %s15, 1
      %p67 = por %p65, %p66
      %p68 = scmp.ne.s32.totalorder %s60, %s63
      %p69 = scmp.eq.s32.totalorder %s15, 0
      %p70 = por %p68, %p69
      %p71 = scmp.ne.s32.totalorder %s60, %s63
      %p72 = scmp.eq.s32.totalorder %s20, 1
      %p73 = por %p71, %p72
      %p74 = scmp.ne.s32.totalorder %s63, %s64
      %p75 = scmp.eq.s32.totalorder %s20, 0
      %p76 = por %p74, %p75
      %p77 = scmp.ne.s32.totalorder %s63, %s64
      %p78 = scmp.eq.s32.totalorder %s21, 1
      %p79 = por %p77, %p78
      %p81 = scmp.ne.s32.totalorder %s64, %s80
      %p82 = scmp.eq.s32.totalorder %s21, 0
      %p83 = por %p81, %p82
      %s84 = ssub.s32 %s22, %s34
      %s85 = ssub.s32 %s23, %s30
      %s86 = sor.u32 %s84, %s85
      %p87 = scmp.eq.s32.totalorder %s86, 0
      %s89 = sadd.s32 %s88, 1
      %s90 = scalar_select %p87, %s88, %s89
      %p93 = pneg %p87
      %p94 = scmp.eq.s32.totalorder %s15, 1
      %p95 = por %p93, %p94
      %p96 = scmp.ne.s32.totalorder %s88, %s91
      %p97 = scmp.eq.s32.totalorder %s15, 0
      %p98 = por %p96, %p97
      %p99 = scmp.ne.s32.totalorder %s88, %s91
      %p100 = scmp.eq.s32.totalorder %s20, 1
      %p101 = por %p99, %p100
      %p102 = scmp.ne.s32.totalorder %s91, %s92
      %p103 = scmp.eq.s32.totalorder %s20, 0
      %p104 = por %p102, %p103
      %p105 = scmp.ne.s32.totalorder %s91, %s92
      %p106 = scmp.eq.s32.totalorder %s21, 1
      %p107 = por %p105, %p106
      %p109 = scmp.ne.s32.totalorder %s92, %s108
      %p110 = scmp.eq.s32.totalorder %s21, 0
      %p111 = por %p109, %p110
      %p112 = scmp.le.s32.totalorder 1, %s15
      %p113 = scmp.lt.s32.totalorder %s15, 3
      %p114 = pnand %p112, %p113
      %p115 = pneg %p114
      // Predicated region
      $region9: #{tpu_custom_call.1} parent=5 // pred_check
        _
      $region10: #{tpu_custom_call.1} parent=5 // pred_check_branch
        %117 = sbr.rel (%p114) target = $region12
      $region11: #{tpu_custom_call.1} parent=5 // pred_region
        %s118 = ssub.s32 %s15, 1
        // Predicated region
        $region13: #{tpu_custom_call.1} parent=11 // pred_check
          %p119 = pneg %p48
        $region14: #{tpu_custom_call.1} parent=11 // pred_check_branch
          %121 = sbr.rel (%p119) target = $region16
        $region15: #{tpu_custom_call.1} parent=11 // pred_region
          %123 = vsyncadd [#allocation5], 0
          %s125 = sshll.u32 %s0, 4
          %s126 = int_to_ptr.hbm [resolvable:$true] %s125
          %128 = dma.hbm_to_smem %s126, 16, [#allocation2], [#allocation5]
        $region16: #{tpu_custom_call.1} parent=11 // pred_fallthru
          _
      $region12: #{tpu_custom_call.1} parent=5 // pred_fallthru
        _
      %p129 = scmp.lt.s32.totalorder %s15, 2
      // Predicated region
      $region17: #{tpu_custom_call.1} parent=5 // pred_check
        %p130 = pneg %p129
      $region18: #{tpu_custom_call.1} parent=5 // pred_check_branch
        %132 = sbr.rel (%p130) target = $region20
      $region19: #{tpu_custom_call.1} parent=5 // pred_region
        // Predicated region
        $region21: #{tpu_custom_call.1} parent=19 // pred_check
          %p133 = pneg %p70
        $region22: #{tpu_custom_call.1} parent=19 // pred_check_branch
          %135 = sbr.rel (%p133) target = $region24
        $region23: #{tpu_custom_call.1} parent=19 // pred_region
          %s136 = sand.u32 %s60, 1
          %s137 = scalar_lea.sflag [#allocation3], %s136
          %s138 = sand.u32 %s60, 1
          %s139 = smul.addr %s138, 24
          %s140 = scalar_lea.vmem [#allocation6], %s139
          %142 = vsyncadd %s137, 0
          %s143 = smul.addr %s22, 3
          %s144 = sadd.s32 %s23, %s143
          %s145 = smul.addr %s144, 8
          %s146 = scalar_lea.hbm %s1, %s145
          %s147 = sshll.u32 %s146, 4
          %s148 = int_to_ptr.hbm [resolvable:$true] %s147
          %s149 = sshll.u32 %s140, 4
          %s150 = int_to_ptr.vmem [resolvable:$true] %s149
          %155 = dma.hbm_to_vmem [thread:$0]  %s148, 384, %s150, %s137, 128, 128, 8
        $region24: #{tpu_custom_call.1} parent=19 // pred_fallthru
          _
      $region20: #{tpu_custom_call.1} parent=5 // pred_fallthru
        _
      %p156 = scmp.le.s32.totalorder 1, %s15
      %p157 = scmp.lt.s32.totalorder %s15, 3
      %p158 = pnand %p156, %p157
      %p159 = pneg %p158
      // Predicated region
      $region25: #{tpu_custom_call.1} parent=5 // pred_check
        _
      $region26: #{tpu_custom_call.1} parent=5 // pred_check_branch
        %161 = sbr.rel (%p158) target = $region28
      $region27: #{tpu_custom_call.1} parent=5 // pred_region
        %s162 = ssub.s32 %s15, 1
        // Predicated region
        $region29: #{tpu_custom_call.1} parent=27 // pred_check
          %p163 = pneg %p48
        $region30: #{tpu_custom_call.1} parent=27 // pred_check_branch
          %165 = sbr.rel (%p163) target = $region32
        $region31: #{tpu_custom_call.1} parent=27 // pred_region
          %167 = dma.done [#allocation5], 16
        $region32: #{tpu_custom_call.1} parent=27 // pred_fallthru
          _
        %s168 = sand.u32 %s63, 1
        %s169 = scalar_lea.sflag [#allocation3], %s168
        %s170 = sand.u32 %s63, 1
        %s171 = smul.addr %s170, 24
        %s172 = scalar_lea.vmem [#allocation6], %s171
        // Predicated region
        $region33: #{tpu_custom_call.1} parent=27 // pred_check
          %p173 = pneg %p76
        $region34: #{tpu_custom_call.1} parent=27 // pred_check_branch
          %175 = sbr.rel (%p173) target = $region36
        $region35: #{tpu_custom_call.1} parent=27 // pred_region
          %177 = dma.done %s169, 384
        $region36: #{tpu_custom_call.1} parent=27 // pred_fallthru
          _
        %178 = sfence
        %p179 = pneg %p48
        %p180 = pneg %p45
        %s181 = sand.u32 %s63, 1
        %s182 = scalar_lea.sflag [#allocation3], %s181
        %s183 = sand.u32 %s63, 1
        %s184 = smul.addr %s183, 24
        %s185 = scalar_lea.vmem [#allocation6], %s184
        %p186 = pneg %p76
        %p187 = pneg %p73
        %p188 = pneg %p104
        %p189 = pneg %p101
        %s190 = sand.u32 %s91, 1
        %s191 = scalar_lea.sflag [#allocation4], %s190
        %s192 = sand.u32 %s91, 1
        %s193 = smul.addr %s192, 8
        %s194 = scalar_lea.vmem [#allocation7], %s193
        %s195 = smul.u32 %s24, 3
        %v196 = vld [vmem:[%s172] sm:$0xff]
        %s197 = sld [smem:[#allocation2 + %s195]]
        %v198 = vstv %s197
        %v199 = vmul.f32 %v196, %v198
        %s200 = scalar_lea.vmem %s172, 8 [#allocation6]
        %v201 = vld [vmem:[%s200] sm:$0xff]
        %s202 = sadd.s32 %s195, 1
        %s203 = sld [smem:[#allocation2 + %s202]]
        %v204 = vstv %s203
        %v205 = vmul.f32 %v201, %v204
        %v206 = vadd.f32 %v199, %v205
        %s207 = scalar_lea.vmem %s172, 16 [#allocation6]
        %v208 = vld [vmem:[%s207] sm:$0xff]
        %s209 = sadd.s32 %s195, 2
        %s210 = sld [smem:[#allocation2 + %s209]]
        %v211 = vstv %s210
        %v212 = vmul.f32 %v208, %v211
        %v213 = vadd.f32 %v206, %v212
        %214 = vst [vmem:[%s194] sm:$0xff] %v213
        %s215 = sand.u32 %s91, 1
        %s216 = scalar_lea.sflag [#allocation4], %s215
        %s217 = sand.u32 %s91, 1
        %s218 = smul.addr %s217, 8
        %s219 = scalar_lea.vmem [#allocation7], %s218
        // Predicated region
        $region37: #{tpu_custom_call.1} parent=27 // pred_check
          %p220 = pneg %p101
        $region38: #{tpu_custom_call.1} parent=27 // pred_check_branch
          %222 = sbr.rel (%p220) target = $region40
        $region39: #{tpu_custom_call.1} parent=27 // pred_region
          %224 = vsyncadd %s216, 0
          %s225 = sadd.s32 %s25, %s24
          %s226 = smul.addr %s225, 8
          %s227 = scalar_lea.hbm %s2, %s226
          %s229 = sshll.u32 %s219, 4
          %s230 = int_to_ptr.vmem [resolvable:$true] %s229
          %s231 = sshll.u32 %s227, 4
          %s232 = int_to_ptr.hbm [resolvable:$true] %s231
          %234 = dma.vmem_to_hbm [thread:$0]  %s230, 128, %s232, %s216
        $region40: #{tpu_custom_call.1} parent=27 // pred_fallthru
          _
      $region28: #{tpu_custom_call.1} parent=5 // pred_fallthru
        _
      %p235 = scmp.le.s32.totalorder 2, %s15
      // Predicated region
      $region41: #{tpu_custom_call.1} parent=5 // pred_check
        %p236 = pneg %p235
      $region42: #{tpu_custom_call.1} parent=5 // pred_check_branch
        %238 = sbr.rel (%p236) target = $region44
      $region43: #{tpu_custom_call.1} parent=5 // pred_region
        %s239 = ssub.s32 %s15, 2
        // Predicated region
        $region45: #{tpu_custom_call.1} parent=43 // pred_check
          %p240 = pneg %p107
        $region46: #{tpu_custom_call.1} parent=43 // pred_check_branch
          %242 = sbr.rel (%p240) target = $region48
        $region47: #{tpu_custom_call.1} parent=43 // pred_region
          %s243 = sand.u32 %s92, 1
          %s244 = scalar_lea.sflag [#allocation4], %s243
          %s245 = sand.u32 %s92, 1
          %s246 = smul.addr %s245, 8
          %s247 = scalar_lea.vmem [#allocation7], %s246
          %249 = dma.done %s244, 128
        $region48: #{tpu_custom_call.1} parent=43 // pred_fallthru
          _
      $region44: #{tpu_custom_call.1} parent=5 // pred_fallthru
        _
    $region6: #{tpu_custom_call.1} parent=1 // loop_footer
      %s19 = sadd.s32 1, %s15
    $region7: #{tpu_custom_call.1} parent=1 // loop_footer_branch
      %14 = sbr.rel target = $region3
    $region8: #{tpu_custom_call.1} parent=1 // loop_exit
      _
    %250 = vsyncpa [#allocation3], 1
    %s251 = scalar_lea.sflag [#allocation3], 1
    %252 = vsyncpa %s251, 1
    %253 = vsyncpa [#allocation4], 1
    %s254 = scalar_lea.sflag [#allocation4], 1
    %255 = vsyncpa %s254, 1
    %256 = vsyncpa [#allocation5], 1
    %s257 = scalar_lea.sflag [#allocation5], 1
    %258 = vsyncpa %s257, 1

</llo_original>
